<compile_context>
chip_gen: v7x
topology: tpu7x:2x2x1
jax: 0.10.0
libtpu: 0.0.40
codegen_flags: <defaults>
</compile_context>

<pallas_src>
import math

import jax
import jax.numpy as jnp
from jax.experimental import pallas as pl
from jax.experimental.pallas import tpu as pltpu


# ----------------------------------------------------------------------------
# Kernel
# ----------------------------------------------------------------------------
def _timestep_embedding_kernel(t_ref, freqs_ref, phase_ref, w1_ref, b1_ref,
                               w2_ref, b2_ref, o_ref):
    # ---- SinusPositionEmbedding via phase table ----------------------------
    # freqs_ref already has `scale` folded in and is duplicated across both
    # halves; phase_ref is 0 for the sin half and pi/2 for the cos half.
    t = t_ref[...]                                           # (tm, 1) f32
    emb = jnp.sin(t * freqs_ref[...] + phase_ref[...])       # (tm, freq_dim) f32

    # ---- time_emb: Linear(freq_dim -> dim), single K=freq_dim dot ----------
    # bf16 MXU operands, f32 accumulation.
    h = jnp.dot(emb.astype(w1_ref.dtype), w1_ref[...],
                preferred_element_type=jnp.float32)
    h = h + b1_ref[...]                                      # (tm, dim) f32

    # ---- SiLU (f32 elementwise; portable to v5e) ----------------------------
    h = h * jax.nn.sigmoid(h)

    # ---- proj: Linear(dim -> dim), kept fully f32 (tiny matmul) -------------
    out = jnp.dot(h, w2_ref[...], preferred_element_type=jnp.float32)
    out = out + b2_ref[...]                                  # (tm, dim) f32

    o_ref[...] = out.astype(o_ref.dtype)


# ----------------------------------------------------------------------------
# One-time parameter preparation ("module init") - no per-call weight ops.
# ----------------------------------------------------------------------------
def init_timestep_embedding(w1, b1, w2, b2, *, scale: float = 1000.0):
    """w1: (freq_dim, dim) [= torch weight.T]; b1: (dim,);
    w2: (dim, dim) [= torch weight.T]; b2: (dim,)."""
    freq_dim, dim = w1.shape
    assert freq_dim % 2 == 0 and freq_dim >= 4, "freq_embed_dim must be even and >= 4"
    half = freq_dim // 2

    # Frequency table with `scale` folded in, duplicated for sin/cos halves,
    # plus a pi/2 phase on the cos half: sin(x + pi/2) == cos(x).
    k = jnp.arange(half, dtype=jnp.float32)
    base = scale * jnp.exp(k * (-math.log(10000.0) / (half - 1)))
    freqs_full = jnp.concatenate([base, base]).reshape(1, freq_dim)
    phase = jnp.concatenate(
        [jnp.zeros((half,), jnp.float32),
         jnp.full((half,), math.pi / 2.0, jnp.float32)]).reshape(1, freq_dim)

    params = {
        "freqs": jax.device_put(freqs_full),
        "phase": jax.device_put(phase),
        "w1": jax.device_put(w1.astype(jnp.bfloat16)),       # MXU operand
        "b1": jax.device_put(b1.reshape(1, dim).astype(jnp.float32)),
        "w2": jax.device_put(w2.astype(jnp.float32)),         # tiny; keep f32
        "b2": jax.device_put(b2.reshape(1, dim).astype(jnp.float32)),
        "dim": dim,
        "freq_dim": freq_dim,
    }
    return params


def _round_up(x, m):
    return ((x + m - 1) // m) * m


def _row_tile(B):
    if B < 16:
        return B
    # >= 2 grid steps so v7x's 2 TensorCores both get work; 512-row cap
    # amortizes the ~0.35 us per-step overhead while keeping (tm, freq_dim)
    # f32 temporaries small on every generation.
    return min(_round_up(pl.cdiv(B, 2), 8), 512)


# ----------------------------------------------------------------------------
# Per-call wrapper: no weight slicing / casting here.
# ----------------------------------------------------------------------------
def timestep_embedding(timestep, params):
    """timestep: (B,) f32. Returns (B, dim) f32."""
    B = timestep.shape[0]
    dim = params["dim"]
    freq_dim = params["freq_dim"]

    t2d = timestep.reshape(B, 1).astype(jnp.float32)

    tm = _row_tile(B)
    grid = (pl.cdiv(B, tm),)

    row = lambda shape: pl.BlockSpec(shape, lambda i: (i, 0))
    rep = lambda shape: pl.BlockSpec(shape, lambda i: (0, 0))

    cost = pl.CostEstimate(
        flops=2 * B * (freq_dim * dim + dim * dim),
        transcendentals=B * (freq_dim + dim),          # sin + sigmoid
        bytes_accessed=(B * 4                          # timestep
                        + 2 * freq_dim * 4             # freqs + phase
                        + freq_dim * dim * 2           # w1 (bf16)
                        + dim * dim * 4                # w2 (f32)
                        + 2 * dim * 4                  # biases
                        + B * dim * 4),                # output
    )

    return pl.pallas_call(
        _timestep_embedding_kernel,
        out_shape=jax.ShapeDtypeStruct((B, dim), jnp.float32),
        grid=grid,
        in_specs=[
            row((tm, 1)),             # timestep rows
            rep((1, freq_dim)),       # frequency table (constant)
            rep((1, freq_dim)),       # phase table (constant)
            rep((freq_dim, dim)),     # w1 (bf16, resident)
            rep((1, dim)),            # b1
            rep((dim, dim)),          # w2 (f32, resident)
            rep((1, dim)),            # b2
        ],
        out_specs=row((tm, dim)),
        compiler_params=pltpu.CompilerParams(
            dimension_semantics=("parallel",)),
        cost_estimate=cost,
    )(t2d, params["freqs"], params["phase"], params["w1"], params["b1"],
      params["w2"], params["b2"])


# ----------------------------------------------------------------------------
# Pure-JAX f32 reference matching the PyTorch forward.
# ----------------------------------------------------------------------------
def timestep_embedding_ref(timestep, w1, b1, w2, b2, *, scale: float = 1000.0):
    freq_dim = w1.shape[0]
    half = freq_dim // 2
    e = math.log(10000.0) / (half - 1)
    freqs = jnp.exp(jnp.arange(half, dtype=jnp.float32) * -e)
    arg = scale * timestep[:, None] * freqs[None, :]
    emb = jnp.concatenate([jnp.sin(arg), jnp.cos(arg)], axis=-1)
    h = emb @ w1 + b1
    h = h * jax.nn.sigmoid(h)
    return h @ w2 + b2


if __name__ == "__main__":
    # Small, module-consistent shapes: batch=4, dim=32, freq_embed_dim=256.
    B = 4
    dim = 32
    freq_embed_dim = 256

    key = jax.random.PRNGKey(0)
    k_t, k_w1, k_b1, k_w2, k_b2 = jax.random.split(key, 5)

    timestep = jax.random.uniform(k_t, (B,), dtype=jnp.float32)  # t in [0, 1)

    # Deterministic synthetic parameters (PyTorch Linear-like uniform init).
    lim1 = 1.0 / math.sqrt(freq_embed_dim)
    lim2 = 1.0 / math.sqrt(dim)
    # Weights stored as (in_features, out_features) == PyTorch weight.T
    w1 = jax.random.uniform(k_w1, (freq_embed_dim, dim), jnp.float32, -lim1, lim1)
    b1 = jax.random.uniform(k_b1, (dim,), jnp.float32, -lim1, lim1)
    w2 = jax.random.uniform(k_w2, (dim, dim), jnp.float32, -lim2, lim2)
    b2 = jax.random.uniform(k_b2, (dim,), jnp.float32, -lim2, lim2)

    # One-time init (tables, bf16 cast of w1) - not on the per-call path.
    params = init_timestep_embedding(w1, b1, w2, b2, scale=1000.0)

    out = timestep_embedding(timestep, params)
    jax.block_until_ready(out)

    ref = timestep_embedding_ref(timestep, w1, b1, w2, b2, scale=1000.0)
    assert out.shape == (B, dim), out.shape
    # Tolerance accounts for bf16 MXU operands in the first Linear (f32 accum;
    # second Linear is fully f32).
    assert jnp.allclose(out, ref, atol=2e-2, rtol=2e-2), float(jnp.max(jnp.abs(out - ref)))

    print("KERNEL_OK")
</pallas_src>

<mosaic_0001>
module attributes {stable_mosaic.version = 11 : i64} {
  func.func @_timestep_embedding_kernel(%arg0: i32, %arg1: memref<4x1xf32, #tpu.memory_space<vmem>>, %arg2: memref<1x256xf32, #tpu.memory_space<vmem>>, %arg3: memref<1x256xf32, #tpu.memory_space<vmem>>, %arg4: memref<256x32xbf16, #tpu.memory_space<vmem>>, %arg5: memref<1x32xf32, #tpu.memory_space<vmem>>, %arg6: memref<32x32xf32, #tpu.memory_space<vmem>>, %arg7: memref<1x32xf32, #tpu.memory_space<vmem>>, %arg8: memref<4x32xf32, #tpu.memory_space<vmem>>) attributes {dimension_semantics = [#tpu.dimension_semantics<parallel>], iteration_bounds = array<i64: 1>, scalar_prefetch = 0 : i64, scratch_operands = 0 : i64, tpu.core_type = #tpu.core_type<tc>, window_params = [{transform_indices = @transform_0, window_bounds = array<i64: 4, 1>}, {pipeline_mode = #tpu.pipeline_mode<synchronous>, transform_indices = @transform_1, window_bounds = array<i64: 1, 256>}, {pipeline_mode = #tpu.pipeline_mode<synchronous>, transform_indices = @transform_2, window_bounds = array<i64: 1, 256>}, {pipeline_mode = #tpu.pipeline_mode<synchronous>, transform_indices = @transform_3, window_bounds = array<i64: 256, 32>}, {pipeline_mode = #tpu.pipeline_mode<synchronous>, transform_indices = @transform_4, window_bounds = array<i64: 1, 32>}, {pipeline_mode = #tpu.pipeline_mode<synchronous>, transform_indices = @transform_5, window_bounds = array<i64: 32, 32>}, {pipeline_mode = #tpu.pipeline_mode<synchronous>, transform_indices = @transform_6, window_bounds = array<i64: 1, 32>}, {transform_indices = @transform_7, window_bounds = array<i64: 4, 32>}]} {
    %c0 = arith.constant 0 : index
    %c0_0 = arith.constant 0 : index
    %0 = vector.load %arg1[%c0, %c0_0] : memref<4x1xf32, #tpu.memory_space<vmem>>, vector<4x1xf32>
    %c0_1 = arith.constant 0 : index
    %c0_2 = arith.constant 0 : index
    %1 = vector.load %arg2[%c0_1, %c0_2] : memref<1x256xf32, #tpu.memory_space<vmem>>, vector<1x256xf32>
    %2 = vector.broadcast %0 : vector<4x1xf32> to vector<4x256xf32>
    %3 = vector.broadcast %1 : vector<1x256xf32> to vector<4x256xf32>
    %4 = arith.mulf %2, %3 : vector<4x256xf32>
    %c0_3 = arith.constant 0 : index
    %c0_4 = arith.constant 0 : index
    %5 = vector.load %arg3[%c0_3, %c0_4] : memref<1x256xf32, #tpu.memory_space<vmem>>, vector<1x256xf32>
    %6 = vector.broadcast %5 : vector<1x256xf32> to vector<4x256xf32>
    %7 = arith.addf %4, %6 : vector<4x256xf32>
    %8 = math.sin %7 : vector<4x256xf32>
    %9 = arith.truncf %8 : vector<4x256xf32> to vector<4x256xbf16>
    %c0_5 = arith.constant 0 : index
    %c0_6 = arith.constant 0 : index
    %10 = vector.load %arg4[%c0_5, %c0_6] : memref<256x32xbf16, #tpu.memory_space<vmem>>, vector<256x32xbf16>
    %cst = arith.constant dense<0.000000e+00> : vector<4x32xf32>
    %11 = tpu.matmul %9, %10, %cst {dimension_numbers = #tpu.dot_dimension_numbers<[1], [0], [0], [1], [0, 0, 1, 1], [], []>} : vector<4x256xbf16>, vector<256x32xbf16>, vector<4x32xf32> -> vector<4x32xf32>
    %c0_7 = arith.constant 0 : index
    %c0_8 = arith.constant 0 : index
    %12 = vector.load %arg5[%c0_7, %c0_8] : memref<1x32xf32, #tpu.memory_space<vmem>>, vector<1x32xf32>
    %13 = vector.broadcast %12 : vector<1x32xf32> to vector<4x32xf32>
    %14 = arith.addf %11, %13 : vector<4x32xf32>
    %15 = arith.negf %14 : vector<4x32xf32>
    %16 = math.exp %15 : vector<4x32xf32>
    %cst_9 = arith.constant 1.000000e+00 : f32
    %17 = vector.broadcast %cst_9 : f32 to vector<4x32xf32>
    %18 = arith.addf %17, %16 : vector<4x32xf32>
    %19 = arith.divf %17, %18 : vector<4x32xf32>
    %20 = arith.mulf %14, %19 : vector<4x32xf32>
    %c0_10 = arith.constant 0 : index
    %c0_11 = arith.constant 0 : index
    %21 = vector.load %arg6[%c0_10, %c0_11] : memref<32x32xf32, #tpu.memory_space<vmem>>, vector<32x32xf32>
    %cst_12 = arith.constant dense<0.000000e+00> : vector<4x32xf32>
    %22 = tpu.matmul %20, %21, %cst_12 {dimension_numbers = #tpu.dot_dimension_numbers<[1], [0], [0], [1], [0, 0, 1, 1], [], []>} : vector<4x32xf32>, vector<32x32xf32>, vector<4x32xf32> -> vector<4x32xf32>
    %c0_13 = arith.constant 0 : index
    %c0_14 = arith.constant 0 : index
    %23 = vector.load %arg7[%c0_13, %c0_14] : memref<1x32xf32, #tpu.memory_space<vmem>>, vector<1x32xf32>
    %24 = vector.broadcast %23 : vector<1x32xf32> to vector<4x32xf32>
    %25 = arith.addf %22, %24 : vector<4x32xf32>
    %c0_15 = arith.constant 0 : index
    %c0_16 = arith.constant 0 : index
    %26 = vector.load %arg8[%c0_15, %c0_16] : memref<4x32xf32, #tpu.memory_space<vmem>>, vector<4x32xf32>
    tpu.vector_store %arg8[%c0_15, %c0_16], %25 {strides = array<i32>} : memref<4x32xf32, #tpu.memory_space<vmem>>, vector<4x32xf32>,
    return
  }
  func.func @transform_0(%arg0: i32) -> (i32, i32) {
    %c0_i32 = arith.constant 0 : i32
    %c0_i32_0 = arith.constant 0 : i32
    return %arg0, %c0_i32 : i32, i32
  }
  func.func @transform_1(%arg0: i32) -> (i32, i32) {
    %c0_i32 = arith.constant 0 : i32
    %c0_i32_0 = arith.constant 0 : i32
    %c0_i32_1 = arith.constant 0 : i32
    return %c0_i32, %c0_i32_0 : i32, i32
  }
  func.func @transform_2(%arg0: i32) -> (i32, i32) {
    %c0_i32 = arith.constant 0 : i32
    %c0_i32_0 = arith.constant 0 : i32
    %c0_i32_1 = arith.constant 0 : i32
    return %c0_i32, %c0_i32_0 : i32, i32
  }
  func.func @transform_3(%arg0: i32) -> (i32, i32) {
    %c0_i32 = arith.constant 0 : i32
    %c0_i32_0 = arith.constant 0 : i32
    %c0_i32_1 = arith.constant 0 : i32
    return %c0_i32, %c0_i32_0 : i32, i32
  }
  func.func @transform_4(%arg0: i32) -> (i32, i32) {
    %c0_i32 = arith.constant 0 : i32
    %c0_i32_0 = arith.constant 0 : i32
    %c0_i32_1 = arith.constant 0 : i32
    return %c0_i32, %c0_i32_0 : i32, i32
  }
  func.func @transform_5(%arg0: i32) -> (i32, i32) {
    %c0_i32 = arith.constant 0 : i32
    %c0_i32_0 = arith.constant 0 : i32
    %c0_i32_1 = arith.constant 0 : i32
    return %c0_i32, %c0_i32_0 : i32, i32
  }
  func.func @transform_6(%arg0: i32) -> (i32, i32) {
    %c0_i32 = arith.constant 0 : i32
    %c0_i32_0 = arith.constant 0 : i32
    %c0_i32_1 = arith.constant 0 : i32
    return %c0_i32, %c0_i32_0 : i32, i32
  }
  func.func @transform_7(%arg0: i32) -> (i32, i32) {
    %c0_i32 = arith.constant 0 : i32
    %c0_i32_0 = arith.constant 0 : i32
    return %arg0, %c0_i32 : i32, i32
  }
}

</mosaic_0001>

<llo_original>
// kernel: tpu_custom_call.1
$region0: #{tpu_custom_call.1}
  #allocation0 [shape = 'u32[]', space=smem, size = 0x4, offset = 0x4, fixed_abs, tag = 'smem constant byte address 0x4 - core index']
  #allocation1 [shape = 'u32[144,128]{1,0:T(1,128)}', space=vmem, size = 0x12000, scoped, tag = 'internal scratch']
  %s0 = inlined_call_operand.vmem [shape: f32[4,1], index: 0, kind: input, shape index: {}]
  %s1 = inlined_call_operand.vmem [shape: f32[1,256], index: 1, kind: input, shape index: {}]
  %s2 = inlined_call_operand.vmem [shape: f32[1,256], index: 2, kind: input, shape index: {}]
  %s3 = inlined_call_operand.vmem [shape: bf16[256,32], index: 3, kind: input, shape index: {}]
  %s4 = inlined_call_operand.vmem [shape: f32[1,32], index: 4, kind: input, shape index: {}]
  %s5 = inlined_call_operand.vmem [shape: f32[32,32], index: 5, kind: input, shape index: {}]
  %s6 = inlined_call_operand.vmem [shape: f32[1,32], index: 6, kind: input, shape index: {}]
  %s7 = inlined_call_operand.hbm [shape: f32[4,32], index: 7, kind: output, shape index: {}]
  %s8 = sld [smem:[#allocation0]]
  $region38: #{tpu_custom_call.1} parent=0
    _
  %s10 = ssub.s32 1, %s8
  %s11 = scalar_select 0, %s10, %s8
  $region1: #{tpu_custom_call.1} parent=0
    #allocation2 [shape = 'u8[2048]{0}', space=vmem, size = 0x800, scoped, tag = 'output window, operand 0, single buffered']
    #allocation3 [shape = 's32[1]{0}', space=sflag, size = 0x4, scoped, tag = 'scoped memory for tpu_custom_call.1']
    %12 = vsyncpa [#allocation3], 0
    // Predicated region
    $region2: #{tpu_custom_call.1} parent=1 // pred_check
      _
    $region3: #{tpu_custom_call.1} parent=1 // pred_check_branch
      %14 = sbr.rel (0) target = $region5
    $region4: #{tpu_custom_call.1} parent=1 // pred_region
      _
    $region5: #{tpu_custom_call.1} parent=1 // pred_fallthru
      _
    // Predicated region
    $region6: #{tpu_custom_call.1} parent=1 // pred_check
      _
    $region7: #{tpu_custom_call.1} parent=1 // pred_check_branch
      %16 = sbr.rel (0) target = $region9
    $region8: #{tpu_custom_call.1} parent=1 // pred_region
      _
    $region9: #{tpu_custom_call.1} parent=1 // pred_fallthru
      _
    // Predicated region
    $region10: #{tpu_custom_call.1} parent=1 // pred_check
      _
    $region11: #{tpu_custom_call.1} parent=1 // pred_check_branch
      %18 = sbr.rel (0) target = $region13
    $region12: #{tpu_custom_call.1} parent=1 // pred_region
      _
    $region13: #{tpu_custom_call.1} parent=1 // pred_fallthru
      _
    // Predicated region
    $region14: #{tpu_custom_call.1} parent=1 // pred_check
      _
    $region15: #{tpu_custom_call.1} parent=1 // pred_check_branch
      %20 = sbr.rel (0) target = $region17
    $region16: #{tpu_custom_call.1} parent=1 // pred_region
      _
    $region17: #{tpu_custom_call.1} parent=1 // pred_fallthru
      _
    // Predicated region
    $region18: #{tpu_custom_call.1} parent=1 // pred_check
      _
    $region19: #{tpu_custom_call.1} parent=1 // pred_check_branch
      %22 = sbr.rel (0) target = $region21
    $region20: #{tpu_custom_call.1} parent=1 // pred_region
      _
    $region21: #{tpu_custom_call.1} parent=1 // pred_fallthru
      _
    // Predicated region
    $region22: #{tpu_custom_call.1} parent=1 // pred_check
      _
    $region23: #{tpu_custom_call.1} parent=1 // pred_check_branch
      %24 = sbr.rel (0) target = $region25
    $region24: #{tpu_custom_call.1} parent=1 // pred_region
      _
    $region25: #{tpu_custom_call.1} parent=1 // pred_fallthru
      _
    // Predicated region
    $region26: #{tpu_custom_call.1} parent=1 // pred_check
      _
    $region27: #{tpu_custom_call.1} parent=1 // pred_check_branch
      %26 = sbr.rel (0) target = $region29
    $region28: #{tpu_custom_call.1} parent=1 // pred_region
      _
    $region29: #{tpu_custom_call.1} parent=1 // pred_fallthru
      _
    %v28 = vld [vmem:[%s0] sm:$0xf]
    %v29 = vld [vmem:[%s1] sm:$0x3]
    %31 = vset.pattern.permute.xlu0 0
    %32 = vperm.xlu0 %31, %v28
    %v33 = vpop.permute.xlu0 %32
    %v36 = vlaneseq
    %v37 = vshrl.u32 %v36, 7
    %v38 = vsub.s32 0, %v37
    %v39 = vrot.slane %v29, %v38
    %v40 = vlaneseq
    %v41 = vshrl.u32 %v40, 7
    %v42 = vsub.s32 1, %v41
    %v43 = vrot.slane %v29, %v42
    %v46 = vmul.f32 %v33, %v39
    %v47 = vmul.f32 %v33, %v43
    %v48 = vld [vmem:[%s2] sm:$0x3]
    %v50 = vlaneseq
    %v51 = vshrl.u32 %v50, 7
    %v52 = vsub.s32 0, %v51
    %v53 = vrot.slane %v48, %v52
    %v54 = vlaneseq
    %v55 = vshrl.u32 %v54, 7
    %v56 = vsub.s32 1, %v55
    %v57 = vrot.slane %v48, %v56
    %v60 = vadd.f32 %v46, %v53
    %v61 = vadd.f32 %v47, %v57
    %v62 = vand.u32 2147483647, %v60
    %vm63 = vcmp.le.f32.partialorder %v62, 0.7853982
    %vm64 = vcmp.lt.s32.totalorder %v60, 0
    %v65 = vand.u32 %v60, 2139095040
    %v66 = vshrl.u32 %v65, 23
    %v67 = vsub.s32 %v66, 127
    %v68 = vand.u32 2147483647, %v60
    %v69 = vand.u32 %v68, 8388607
    %v70 = vor.u32 %v69, 8388608
    %v71 = vsub.s32 0, %v70
    %v72 = vadd.s32 %v67, 1
    %vm73 = vcmp.gt.s32.totalorder %v72, 0
    %v74 = vsel %vm73, %v72, 0
    %v75 = vshrl.u32 %v74, 5
    %v76 = vand.u32 %v74, 31
    %v77 = vsub.s32 32, %v76
    %v78 = vshrl.u32 683565275, %v77
    %v79 = vshll.u32 683565275, %v76
    %v80 = vshrl.u32 2475754826, %v77
    %v81 = vor.u32 %v79, %v80
    %v82 = vshll.u32 2475754826, %v76
    %v83 = vshrl.u32 2131351028, %v77
    %v84 = vor.u32 %v82, %v83
    %v85 = vshll.u32 2131351028, %v76
    %v86 = vshrl.u32 2102212464, %v77
    %v87 = vor.u32 %v85, %v86
    %v88 = vshll.u32 2102212464, %v76
    %v89 = vshrl.u32 920167782, %v77
    %v90 = vor.u32 %v88, %v89
    %v91 = vshll.u32 920167782, %v76
    %v92 = vshrl.u32 1326507024, %v77
    %v93 = vor.u32 %v91, %v92
    %vm94 = vcmp.lt.s32.totalorder %v75, 1
    %vm95 = vcmp.lt.s32.totalorder %v75, 2
    %vm96 = vcmp.lt.s32.totalorder %v75, 3
    %vm97 = vcmp.lt.s32.totalorder %v75, 4
    %v98 = vsel %vm94, %v78, %v81
    %v99 = vsel %vm97, %v87, 2102212464
    %v100 = vsel %vm96, %v84, %v99
    %v101 = vsel %vm95, %v98, %v100
    %v102 = vsel %vm94, %v81, %v84
    %v103 = vsel %vm97, %v90, 920167782
    %v104 = vsel %vm96, %v87, %v103
    %v105 = vsel %vm95, %v102, %v104
    %v106 = vsel %vm94, %v84, %v87
    %v107 = vsel %vm97, %v93, 1326507024
    %v108 = vsel %vm96, %v90, %v107
    %v109 = vsel %vm95, %v106, %v108
    %v110 = vshll.u32 %v70, 8
    %v111 = vmul.u32.u64.compose %v110, %v109
    %v112 = vextract.low.u32 %v111
    %v113 = vextract.high.u32 %v111
    %v114 = vmul.u32.u64.compose %v110, %v105
    %v115 = vextract.low.u32 %v114
    %v116 = vextract.high.u32 %v114
    %v117 = vmul.u32 %v110, %v101
    %v118 = vadd.s32 %v113, %v115
    %vm119 = vc.u32 %v113, %v115
    %v120 = vadd.s32 %v116, 1
    %v121 = vsel %vm119, %v120, %v116
    %v122 = vadd.s32 %v117, %v121
    %v123 = vadd.s32 %v122, 536870912
    %v124 = vshrl.u32 %v123, 30
    %v125 = vshll.u32 %v124, 30
    %v126 = vsub.s32 %v122, %v125
    %vm127 = vcmp.lt.s32.totalorder %v126, 0
    %v128 = vsub.s32 0, %v126
    %v129 = vsel %vm127, %v128, %v126
    %v130 = vclz %v129
    %v131 = vsub.s32 %v130, 2
    %vm132 = vcmp.gt.s32.totalorder 0, %v131
    %v133 = vsel %vm132, 0, %v131
    %v134 = vsub.s32 32, %v133
    %v135 = vshll.u32 %v126, %v133
    %v136 = vshrl.u32 %v118, %v134
    %v137 = vor.u32 %v135, %v136
    %v138 = vsub.s32 4294967266, %v133
    %v139 = vadd.s32 %v138, 127
    %v140 = vshll.u32 %v139, 23
    %v141 = vor.u32 4788187, %v140
    %v142 = vand.u32 2147483647, %v141
    %v144 = vcvt.s32.f32 %v137
    %v145 = vmul.f32 %v144, %v142
    %v146 = vxor.u32 %v145, 2147483648
    %v147 = vsel %vm64, %v146, %v145
    %v148 = vsub.s32 4, %v124
    %v149 = vsel %vm64, %v148, %v124
    %v150 = vsel %vm63, %v60, %v147
    %v151 = vsel %vm63, 0, %v149
    %v152 = vcosq.f32.pop %v150
    %v153 = vsinq.f32.pop %v150
    %vm154 = vweird.f32 %v60
    %v155 = vadd.s32 %v151, 3
    %v156 = vand.u32 %v155, 3
    %vm157 = vcmp.lt.s32.totalorder %v156, 2
    %vm158 = vcmp.eq.s32.totalorder %v156, 0
    %v159 = vxor.u32 %v153, 2147483648
    %v160 = vsel %vm158, %v152, %v159
    %vm161 = vcmp.eq.s32.totalorder %v156, 2
    %v162 = vxor.u32 %v152, 2147483648
    %v163 = vsel %vm161, %v162, %v153
    %v164 = vsel %vm157, %v160, %v163
    %v165 = vsel %vm154, nan, %v164
    %v166 = vand.u32 2147483647, %v61
    %vm167 = vcmp.le.f32.partialorder %v166, 0.7853982
    %vm168 = vcmp.lt.s32.totalorder %v61, 0
    %v169 = vand.u32 %v61, 2139095040
    %v170 = vshrl.u32 %v169, 23
    %v171 = vsub.s32 %v170, 127
    %v172 = vand.u32 2147483647, %v61
    %v173 = vand.u32 %v172, 8388607
    %v174 = vor.u32 %v173, 8388608
    %v175 = vsub.s32 0, %v174
    %v176 = vadd.s32 %v171, 1
    %vm177 = vcmp.gt.s32.totalorder %v176, 0
    %v178 = vsel %vm177, %v176, 0
    %v179 = vshrl.u32 %v178, 5
    %v180 = vand.u32 %v178, 31
    %v181 = vsub.s32 32, %v180
    %v182 = vshrl.u32 683565275, %v181
    %v183 = vshll.u32 683565275, %v180
    %v184 = vshrl.u32 2475754826, %v181
    %v185 = vor.u32 %v183, %v184
    %v186 = vshll.u32 2475754826, %v180
    %v187 = vshrl.u32 2131351028, %v181
    %v188 = vor.u32 %v186, %v187
    %v189 = vshll.u32 2131351028, %v180
    %v190 = vshrl.u32 2102212464, %v181
    %v191 = vor.u32 %v189, %v190
    %v192 = vshll.u32 2102212464, %v180
    %v193 = vshrl.u32 920167782, %v181
    %v194 = vor.u32 %v192, %v193
    %v195 = vshll.u32 920167782, %v180
    %v196 = vshrl.u32 1326507024, %v181
    %v197 = vor.u32 %v195, %v196
    %vm198 = vcmp.lt.s32.totalorder %v179, 1
    %vm199 = vcmp.lt.s32.totalorder %v179, 2
    %vm200 = vcmp.lt.s32.totalorder %v179, 3
    %vm201 = vcmp.lt.s32.totalorder %v179, 4
    %v202 = vsel %vm198, %v182, %v185
    %v203 = vsel %vm201, %v191, 2102212464
    %v204 = vsel %vm200, %v188, %v203
    %v205 = vsel %vm199, %v202, %v204
    %v206 = vsel %vm198, %v185, %v188
    %v207 = vsel %vm201, %v194, 920167782
    %v208 = vsel %vm200, %v191, %v207
    %v209 = vsel %vm199, %v206, %v208
    %v210 = vsel %vm198, %v188, %v191
    %v211 = vsel %vm201, %v197, 1326507024
    %v212 = vsel %vm200, %v194, %v211
    %v213 = vsel %vm199, %v210, %v212
    %v214 = vshll.u32 %v174, 8
    %v215 = vmul.u32.u64.compose %v214, %v213
    %v216 = vextract.low.u32 %v215
    %v217 = vextract.high.u32 %v215
    %v218 = vmul.u32.u64.compose %v214, %v209
    %v219 = vextract.low.u32 %v218
    %v220 = vextract.high.u32 %v218
    %v221 = vmul.u32 %v214, %v205
    %v222 = vadd.s32 %v217, %v219
    %vm223 = vc.u32 %v217, %v219
    %v224 = vadd.s32 %v220, 1
    %v225 = vsel %vm223, %v224, %v220
    %v226 = vadd.s32 %v221, %v225
    %v227 = vadd.s32 %v226, 536870912
    %v228 = vshrl.u32 %v227, 30
    %v229 = vshll.u32 %v228, 30
    %v230 = vsub.s32 %v226, %v229
    %vm231 = vcmp.lt.s32.totalorder %v230, 0
    %v232 = vsub.s32 0, %v230
    %v233 = vsel %vm231, %v232, %v230
    %v234 = vclz %v233
    %v235 = vsub.s32 %v234, 2
    %vm236 = vcmp.gt.s32.totalorder 0, %v235
    %v237 = vsel %vm236, 0, %v235
    %v238 = vsub.s32 32, %v237
    %v239 = vshll.u32 %v230, %v237
    %v240 = vshrl.u32 %v222, %v238
    %v241 = vor.u32 %v239, %v240
    %v242 = vsub.s32 4294967266, %v237
    %v243 = vadd.s32 %v242, 127
    %v244 = vshll.u32 %v243, 23
    %v245 = vor.u32 4788187, %v244
    %v246 = vand.u32 2147483647, %v245
    %v248 = vcvt.s32.f32 %v241
    %v249 = vmul.f32 %v248, %v246
    %v250 = vxor.u32 %v249, 2147483648
    %v251 = vsel %vm168, %v250, %v249
    %v252 = vsub.s32 4, %v228
    %v253 = vsel %vm168, %v252, %v228
    %v254 = vsel %vm167, %v61, %v251
    %v255 = vsel %vm167, 0, %v253
    %v256 = vcosq.f32.pop %v254
    %v257 = vsinq.f32.pop %v254
    %vm258 = vweird.f32 %v61
    %v259 = vadd.s32 %v255, 3
    %v260 = vand.u32 %v259, 3
    %vm261 = vcmp.lt.s32.totalorder %v260, 2
    %vm262 = vcmp.eq.s32.totalorder %v260, 0
    %v263 = vxor.u32 %v257, 2147483648
    %v264 = vsel %vm262, %v256, %v263
    %vm265 = vcmp.eq.s32.totalorder %v260, 2
    %v266 = vxor.u32 %v256, 2147483648
    %v267 = vsel %vm265, %v266, %v257
    %v268 = vsel %vm261, %v264, %v267
    %v269 = vsel %vm258, nan, %v268
    %v270 = vpack.c.bf16 %v165, %v165
    %v271 = vpack.c.bf16 %v269, %v269
    %v272 = vld [vmem:[%s3] sm:$0xf]
    %v273 = vld [vmem:[%s3 + $0x4] sm:$0xf]
    %v274 = vld [vmem:[%s3 + $0x8] sm:$0xf]
    %v275 = vld [vmem:[%s3 + $0xc] sm:$0xf]
    %v276 = vld [vmem:[%s3 + $0x10] sm:$0xf]
    %v277 = vld [vmem:[%s3 + $0x14] sm:$0xf]
    %v278 = vld [vmem:[%s3 + $0x18] sm:$0xf]
    %v279 = vld [vmem:[%s3 + $0x1c] sm:$0xf]
    %v280 = vld [vmem:[%s3 + $0x20] sm:$0xf]
    %v281 = vld [vmem:[%s3 + $0x24] sm:$0xf]
    %v282 = vld [vmem:[%s3 + $0x28] sm:$0xf]
    %v283 = vld [vmem:[%s3 + $0x2c] sm:$0xf]
    %v284 = vld [vmem:[%s3 + $0x30] sm:$0xf]
    %v285 = vld [vmem:[%s3 + $0x34] sm:$0xf]
    %v286 = vld [vmem:[%s3 + $0x38] sm:$0xf]
    %v287 = vld [vmem:[%s3 + $0x3c] sm:$0xf]
    %v288 = vld [vmem:[%s3 + $0x40] sm:$0xf]
    %v289 = vld [vmem:[%s3 + $0x44] sm:$0xf]
    %v290 = vld [vmem:[%s3 + $0x48] sm:$0xf]
    %v291 = vld [vmem:[%s3 + $0x4c] sm:$0xf]
    %v292 = vld [vmem:[%s3 + $0x50] sm:$0xf]
    %v293 = vld [vmem:[%s3 + $0x54] sm:$0xf]
    %v294 = vld [vmem:[%s3 + $0x58] sm:$0xf]
    %v295 = vld [vmem:[%s3 + $0x5c] sm:$0xf]
    %v296 = vld [vmem:[%s3 + $0x60] sm:$0xf]
    %v297 = vld [vmem:[%s3 + $0x64] sm:$0xf]
    %v298 = vld [vmem:[%s3 + $0x68] sm:$0xf]
    %v299 = vld [vmem:[%s3 + $0x6c] sm:$0xf]
    %v300 = vld [vmem:[%s3 + $0x70] sm:$0xf]
    %v301 = vld [vmem:[%s3 + $0x74] sm:$0xf]
    %v302 = vld [vmem:[%s3 + $0x78] sm:$0xf]
    %v303 = vld [vmem:[%s3 + $0x7c] sm:$0xf]
    %v304 = vld [vmem:[%s4] sm:$0x1]
    %v306 = vlaneseq
    %v307 = vshrl.u32 %v306, 7
    %v308 = vsub.s32 0, %v307
    %v309 = vrot.slane %v304, %v308
    %v343 = vunpack.c.l.b16 %v272
    %v344 = vunpack.c.l.b16 %v273
    %v345 = vunpack.c.l.b16 %v274
    %v346 = vunpack.c.l.b16 %v275
    %v347 = vunpack.c.l.b16 %v276
    %v348 = vunpack.c.l.b16 %v277
    %v349 = vunpack.c.l.b16 %v278
    %v350 = vunpack.c.l.b16 %v279
    %v351 = vunpack.c.l.b16 %v280
    %v352 = vunpack.c.l.b16 %v281
    %v353 = vunpack.c.l.b16 %v282
    %v354 = vunpack.c.l.b16 %v283
    %v355 = vunpack.c.l.b16 %v284
    %v356 = vunpack.c.l.b16 %v285
    %v357 = vunpack.c.l.b16 %v286
    %v358 = vunpack.c.l.b16 %v287
    %v359 = vunpack.c.l.b16 %v288
    %v360 = vunpack.c.l.b16 %v289
    %v361 = vunpack.c.l.b16 %v290
    %v362 = vunpack.c.l.b16 %v291
    %v363 = vunpack.c.l.b16 %v292
    %v364 = vunpack.c.l.b16 %v293
    %v365 = vunpack.c.l.b16 %v294
    %v366 = vunpack.c.l.b16 %v295
    %v367 = vunpack.c.l.b16 %v296
    %v368 = vunpack.c.l.b16 %v297
    %v369 = vunpack.c.l.b16 %v298
    %v370 = vunpack.c.l.b16 %v299
    %v371 = vunpack.c.l.b16 %v300
    %v372 = vunpack.c.l.b16 %v301
    %v373 = vunpack.c.l.b16 %v302
    %v374 = vunpack.c.l.b16 %v303
    %v375 = vpack.c.b16 %v344, %v343
    %v376 = vpack.c.b16 %v346, %v345
    %v377 = vpack.c.b16 %v348, %v347
    %v378 = vpack.c.b16 %v350, %v349
    %v379 = vpack.c.b16 %v352, %v351
    %v380 = vpack.c.b16 %v354, %v353
    %v381 = vpack.c.b16 %v356, %v355
    %v382 = vpack.c.b16 %v358, %v357
    %v383 = vpack.c.b16 %v360, %v359
    %v384 = vpack.c.b16 %v362, %v361
    %v385 = vpack.c.b16 %v364, %v363
    %v386 = vpack.c.b16 %v366, %v365
    %v387 = vpack.c.b16 %v368, %v367
    %v388 = vpack.c.b16 %v370, %v369
    %v389 = vpack.c.b16 %v372, %v371
    %v390 = vpack.c.b16 %v374, %v373
    %407 = vmatprep.subr.bf16.mxu0 0
    %408 = vmatpush1.bf16.msra.mxu0 %v375
    %409 = vmatprep.subr.bf16.mxu0 0
    %410 = vmatpush1.bf16.msra.mxu0 %v376
    %411 = vmatprep.subr.bf16.mxu0 0
    %412 = vmatpush1.bf16.msra.mxu0 %v377
    %413 = vmatprep.subr.bf16.mxu0 0
    %414 = vmatpush1.bf16.msra.mxu0 %v378
    %415 = vmatprep.subr.bf16.mxu0 0
    %416 = vmatpush1.bf16.msra.mxu0 %v379
    %417 = vmatprep.subr.bf16.mxu0 0
    %418 = vmatpush1.bf16.msra.mxu0 %v380
    %419 = vmatprep.subr.bf16.mxu0 0
    %420 = vmatpush1.bf16.msra.mxu0 %v381
    %421 = vmatprep.subr.bf16.mxu0 0
    %422 = vmatpush1.bf16.msra.mxu0 %v382
    %423 = vmatprep.subr.bf16.mxu0 0
    %424 = vmatpush1.bf16.msra.mxu0 %v383
    %425 = vmatprep.subr.bf16.mxu0 0
    %426 = vmatpush1.bf16.msra.mxu0 %v384
    %427 = vmatprep.subr.bf16.mxu0 0
    %428 = vmatpush1.bf16.msra.mxu0 %v385
    %429 = vmatprep.subr.bf16.mxu0 0
    %430 = vmatpush1.bf16.msra.mxu0 %v386
    %431 = vmatprep.subr.bf16.mxu0 0
    %432 = vmatpush1.bf16.msra.mxu0 %v387
    %433 = vmatprep.subr.bf16.mxu0 0
    %434 = vmatpush1.bf16.msra.mxu0 %v388
    %435 = vmatprep.subr.bf16.mxu0 0
    %436 = vmatpush1.bf16.msra.mxu0 %v389
    %437 = vmatprep.subr.bf16.mxu0 0
    %438 = vmatpush1.bf16.msra.mxu0 %v390
    %439 = vmatprep.mubr.bf16.mxu0 %v271
    %440 = vmatmul.mubr.bf16.gmra.mrb[0].mxu0 %v270
    %v441 = vpop.f32.mrb[0].mxu0
    %v442 = vadd.f32 %v309, %v441
    %v443 = vpop.f32.mrb[0].mxu0
    %v444 = vpop.f32.mrb[0].mxu0
    %v445 = vpop.f32.mrb[0].mxu0
    %446 = vdwg.mxu0
    %v447 = vxor.u32 %v442, 2147483648
    %v448 = vmul.f32 %v447, 1.442695
    %v449 = vpow.pop %v448
    %v450 = vadd.f32 %v449, 1.0
    %v451 = vrcp.pop %v450
    %v452 = vmul.f32 1.0, %v451
    %v453 = vmul.f32 %v442, %v452
    %v454 = vld [vmem:[%s5] sm:$0xff]
    %v455 = vld [vmem:[%s5 + $0x8] sm:$0xff]
    %v456 = vld [vmem:[%s5 + $0x10] sm:$0xff]
    %v457 = vld [vmem:[%s5 + $0x18] sm:$0xff]
    %v458 = vld [vmem:[%s6] sm:$0x1]
    %v460 = vlaneseq
    %v461 = vshrl.u32 %v460, 7
    %v462 = vsub.s32 0, %v461
    %v463 = vrot.slane %v458, %v462
    %vm465 = vcmask 261120
    %v467 = vsel %vm465, %v453, 0
    %469 = vmatprep.subr.mxu0 0.0
    %470 = vmatpush1.msra.mxu0 %v454
    %471 = vmatprep.subr.mxu0 0.0
    %472 = vmatpush1.msra.mxu0 %v455
    %473 = vmatprep.subr.mxu0 0.0
    %474 = vmatpush1.msra.mxu0 %v456
    %475 = vmatprep.subr.mxu0 0.0
    %476 = vmatpush1.msra.mxu0 %v457
    %477 = vmatprep.subr.mxu0 0.0
    %478 = vmatpush1.msra.mxu0 0.0
    %479 = vmatprep.subr.mxu0 0.0
    %480 = vmatpush1.msra.mxu0 0.0
    %481 = vmatprep.subr.mxu0 0.0
    %482 = vmatpush1.msra.mxu0 0.0
    %483 = vmatprep.subr.mxu0 0.0
    %484 = vmatpush1.msra.mxu0 0.0
    %485 = vmatprep.subr.mxu0 0.0
    %486 = vmatpush1.msra.mxu0 0.0
    %487 = vmatprep.subr.mxu0 0.0
    %488 = vmatpush1.msra.mxu0 0.0
    %489 = vmatprep.subr.mxu0 0.0
    %490 = vmatpush1.msra.mxu0 0.0
    %491 = vmatprep.subr.mxu0 0.0
    %492 = vmatpush1.msra.mxu0 0.0
    %493 = vmatprep.subr.mxu0 0.0
    %494 = vmatpush1.msra.mxu0 0.0
    %495 = vmatprep.subr.mxu0 0.0
    %496 = vmatpush1.msra.mxu0 0.0
    %497 = vmatprep.subr.mxu0 0.0
    %498 = vmatpush1.msra.mxu0 0.0
    %499 = vmatprep.subr.mxu0 0.0
    %500 = vmatpush1.msra.mxu0 0.0
    %501 = vmatprep.subr.mxu0 0.0
    %502 = vmatpush1.msra.mxu0 0.0
    %503 = vmatprep.subr.mxu0 0.0
    %504 = vmatpush1.msra.mxu0 0.0
    %505 = vmatprep.subr.mxu0 0.0
    %506 = vmatpush1.msra.mxu0 0.0
    %507 = vmatprep.subr.mxu0 0.0
    %508 = vmatpush1.msra.mxu0 0.0
    %509 = vmatprep.subr.mxu0 0.0
    %510 = vmatpush1.msra.mxu0 0.0
    %511 = vmatprep.subr.mxu0 0.0
    %512 = vmatpush1.msra.mxu0 0.0
    %513 = vmatprep.subr.mxu0 0.0
    %514 = vmatpush1.msra.mxu0 0.0
    %515 = vmatprep.subr.mxu0 0.0
    %516 = vmatpush1.msra.mxu0 0.0
    %517 = vmatprep.subr.mxu0 0.0
    %518 = vmatpush1.msra.mxu0 0.0
    %519 = vmatprep.subr.mxu0 0.0
    %520 = vmatpush1.msra.mxu0 0.0
    %521 = vmatprep.subr.mxu0 0.0
    %522 = vmatpush1.msra.mxu0 0.0
    %523 = vmatprep.subr.mxu0 0.0
    %524 = vmatpush1.msra.mxu0 0.0
    %525 = vmatprep.subr.mxu0 0.0
    %526 = vmatpush1.msra.mxu0 0.0
    %527 = vmatprep.subr.mxu0 0.0
    %528 = vmatpush1.msra.mxu0 0.0
    %529 = vmatprep.subr.mxu0 0.0
    %530 = vmatpush1.msra.mxu0 0.0
    %531 = vmatprep.subr.mxu0 0.0
    %532 = vmatpush1.msra.mxu0 0.0
    %533 = vmatprep.mubr.f32.mxu0 0.0
    %534 = vmatmul.mubr.f32.gmra.mrb[0].mxu0 %v467
    %v535 = vpop.f32.mrb[0].mxu0
    %v536 = vadd.f32 %v463, %v535
    %v537 = vpop.f32.mrb[0].mxu0
    %538 = vdwg.mxu0
    %vm539 = vcmask 257024
    %540 = vst.msk [vmem:[#allocation2] sm:$0xf] %vm539, %v536
    // Predicated region
    $region30: #{tpu_custom_call.1} parent=1 // pred_check
      _
    $region31: #{tpu_custom_call.1} parent=1 // pred_check_branch
      %542 = sbr.rel (0) target = $region33
    $region32: #{tpu_custom_call.1} parent=1 // pred_region
      %s544 = ssub.s32 64, 64
      %545 = vsyncadd [#allocation3], %s544
      %s547 = sshll.u32 [#allocation2], 4
      %s548 = int_to_ptr.vmem [resolvable:$true] %s547
      %550 = dma.vmem_to_hbm [thread:$0]  %s548, 64, %s7, [#allocation3]
    $region33: #{tpu_custom_call.1} parent=1 // pred_fallthru
      _
    // Predicated region
    $region34: #{tpu_custom_call.1} parent=1 // pred_check
      _
    $region35: #{tpu_custom_call.1} parent=1 // pred_check_branch
      %552 = sbr.rel (0) target = $region37
    $region36: #{tpu_custom_call.1} parent=1 // pred_region
      %553 = dma.done [#allocation3], 64
    $region37: #{tpu_custom_call.1} parent=1 // pred_fallthru
      _
    %554 = vsyncpa [#allocation3], 1

</llo_original>
